<compile_context>
chip_gen: v5e
topology: v5e:2x2
jax: 0.10.0
libtpu: 0.0.40
codegen_flags: <defaults>
</compile_context>

<pallas_src>
import functools
import numpy as np
import jax
import jax.numpy as jnp
from jax import lax
from jax.experimental import pallas as pl
from jax.experimental.pallas import tpu as pltpu


# ---------------------------------------------------------------------------
# Kernel 1: fused dictionary loss + hoisted LSTM gate projection (tiled over rows)
# ---------------------------------------------------------------------------
def dict_proj_kernel(x_ref, wxg_ref, bg_ref, pmat_ref, xg_ref, rloss_ref):
    x = x_ref[...]                                                   # (tile_n, D) f32
    # Hoisted input projection for 4 gates x 2 directions (lane-dense 8H columns).
    # Kept f32 here so the dictionary/loss reference stays tight; on v6e/v7x the
    # operands can additionally be cast to bf16 (f32 accumulate) for ~2-4x MXU rate.
    xg_ref[...] = (jnp.dot(x, wxg_ref[...], preferred_element_type=jnp.float32)
                   + bg_ref[...])
    # Residual-based reconstruction loss (review: keep the residual formula; the
    # normal-equation identity is cancellation-prone).  Per-row partials -> no
    # cross-block accumulator, so the grid axis stays "parallel".
    recon = jnp.dot(x, pmat_ref[...], preferred_element_type=jnp.float32)  # (tile_n, D)
    resid = x - recon
    rloss_ref[...] = jnp.sum(resid * resid, axis=1, keepdims=True)   # (tile_n, 1)


def dictionary_and_gate_projection(x_flat, wxg, bg, pmat):
    n, d = x_flat.shape
    g8 = wxg.shape[1]

    # Row tiling: 512 rows is the v6e sweet spot (85%+ of HBM roofline); halve on v7x
    # (64 MiB VMEM) if larger D/P make blocks VMEM-tight.  Pad N with zero rows
    # (zero rows contribute exactly 0 loss and are sliced off afterwards).
    tile_n = 512 if n >= 512 else max(8, -(-n // 8) * 8)
    n_pad = -(-n // tile_n) * tile_n
    if n_pad != n:
        x_flat = jnp.pad(x_flat, ((0, n_pad - n), (0, 0)))
    grid = (n_pad // tile_n,)

    flops = 2 * n_pad * d * (g8 + d) + 3 * n_pad * d
    bytes_accessed = 4 * (n_pad * d + n_pad * g8 + n_pad + d * g8 + d * d + g8)

    xg, row_loss = pl.pallas_call(
        dict_proj_kernel,
        grid=grid,
        in_specs=[
            pl.BlockSpec((tile_n, d), lambda i: (i, 0)),   # x rows (tiled, pipelined)
            pl.BlockSpec((d, g8), lambda i: (0, 0)),       # folded dict+input projection
            pl.BlockSpec((1, g8), lambda i: (0, 0)),       # gate bias
            pl.BlockSpec((d, d), lambda i: (0, 0)),        # reconstruction operator
        ],
        out_specs=(
            pl.BlockSpec((tile_n, g8), lambda i: (i, 0)),  # lane-dense (128 cols) output
            pl.BlockSpec((tile_n, 1), lambda i: (i, 0)),   # per-row loss partials
        ),
        out_shape=(
            jax.ShapeDtypeStruct((n_pad, g8), jnp.float32),
            jax.ShapeDtypeStruct((n_pad, 1), jnp.float32),
        ),
        compiler_params=pltpu.CompilerParams(
            dimension_semantics=("parallel",),             # independent blocks -> 2 TCs on v7x
            vmem_limit_bytes=32 * 1024 * 1024,             # raise for larger tiles on v6e
        ),
        cost_estimate=pl.CostEstimate(flops=flops, transcendentals=0,
                                      bytes_accessed=bytes_accessed),
    )(x_flat, wxg, bg, pmat)

    loss = jnp.sum(row_loss[:n, 0])
    return xg[:n], loss


# ---------------------------------------------------------------------------
# Kernel 2: fused bidirectional LSTM recurrence + output Linear (tiled over batch)
# ---------------------------------------------------------------------------
def bilstm_kernel(lens_ref, xg_ref, whh_ref, wout_ref, bout_ref, o_ref,
                  *, maxlength, h_dir):
    """xg_ref  : (TB, T, 8H) f32  precomputed x-projection (+bias) for i,f,g,o x {fwd,bwd}
       whh_ref : (2H, 8H)   bf16  block-diagonal fused recurrent weights
       gate column layout (width H each): [i_f, i_b, f_f, f_b, g_f, g_b, o_f, o_b]
       state layout: h = [h_fwd | h_bwd]   (TB, 2H)
    """
    H = h_dir
    T = maxlength
    TB = o_ref.shape[0]

    lens = lens_ref[...]                                   # (TB, 1) int32 (vector mask source)
    whh = whh_ref[...]                                     # (2H, 8H) bf16

    # Constant lane masks, hoisted out of the recurrence.
    gcol = lax.broadcasted_iota(jnp.int32, (1, 8 * H), 1)
    fwd_gate_col = (gcol // H) % 2 == 0                    # (1, 8H): column belongs to fwd dir
    scol = lax.broadcasted_iota(jnp.int32, (1, 2 * H), 1)
    fwd_state_col = scol < H                               # (1, 2H)

    h = jnp.zeros((TB, 2 * H), jnp.float32)
    c = jnp.zeros((TB, 2 * H), jnp.float32)

    # maxlength is small & static -> full Python unroll (LLO visibility).
    # TODO(synk): for large maxlength switch to lax.fori_loop(..., unroll=k) to bound
    # vreg live ranges.
    for s in range(T):
        t_b = T - 1 - s                                    # timestep consumed by the bwd dir
        x_f = xg_ref[:, s, :]                              # (TB, 8H) -- per-step ref reads,
        x_b = xg_ref[:, t_b, :]                            #             not a whole-seq load
        xin = jnp.where(fwd_gate_col, x_f, x_b)
        # Single fused recurrent matmul per step: bf16 operands, f32 accumulate (native
        # MXU path on v5e/v6e/v7x); all elementwise/activation math stays f32.
        z = xin + jnp.dot(h.astype(jnp.bfloat16), whh,
                          preferred_element_type=jnp.float32)        # (TB, 8H)
        i_g = jax.nn.sigmoid(z[:, 0 * H:2 * H])
        f_g = jax.nn.sigmoid(z[:, 2 * H:4 * H])
        g_g = jnp.tanh(z[:, 4 * H:6 * H])
        o_g = jax.nn.sigmoid(z[:, 6 * H:8 * H])
        c_new = f_g * c + i_g * g_g
        h_new = o_g * jnp.tanh(c_new)
        # pack_padded_sequence semantics: each direction only advances on valid steps.
        valid = jnp.where(fwd_state_col, lens > s, lens > t_b)       # (TB, 2H) bool
        h = jnp.where(valid, h_new, h)
        c = jnp.where(valid, c_new, c)

    # Output Linear, lane-padded to a 128-wide (unmasked) store; sliced in the wrapper.
    o_ref[...] = (jnp.dot(h, wout_ref[...], preferred_element_type=jnp.float32)
                  + bout_ref[...])


def bilstm_forward(xg, lens, whh_cat, wout_pad, bout_pad, *, maxlength, h_dir, out_dim):
    b = xg.shape[0]
    g8 = xg.shape[2]
    hidden = whh_cat.shape[0]          # 2H
    oc = wout_pad.shape[1]             # lane-padded output width (multiple of 128)

    # Batch tiling (review): blocks of up to 128 rows, "parallel" -> megacore on v7x.
    tb = b if b <= 128 else 128
    b_pad = -(-b // tb) * tb
    if b_pad != b:
        xg = jnp.pad(xg, ((0, b_pad - b), (0, 0), (0, 0)))
        lens = jnp.pad(lens, ((0, b_pad - b), (0, 0)))     # padded rows: len=0 -> h stays 0
    grid = (b_pad // tb,)

    flops = 2 * b_pad * maxlength * hidden * g8 + 12 * b_pad * maxlength * hidden
    transcendentals = 5 * b_pad * maxlength * hidden
    bytes_accessed = (4 * (b_pad * maxlength * g8 + b_pad * oc + b_pad)
                      + 2 * hidden * g8 + 4 * (hidden * oc + oc))

    out_pad = pl.pallas_call(
        functools.partial(bilstm_kernel, maxlength=maxlength, h_dir=h_dir),
        grid=grid,
        in_specs=[
            pl.BlockSpec((tb, 1), lambda i: (i, 0)),               # lens (vector mask source)
            pl.BlockSpec((tb, maxlength, g8), lambda i: (i, 0, 0)),
            pl.BlockSpec((hidden, g8), lambda i: (0, 0)),
            pl.BlockSpec((hidden, oc), lambda i: (0, 0)),
            pl.BlockSpec((1, oc), lambda i: (0, 0)),
        ],
        out_specs=pl.BlockSpec((tb, oc), lambda i: (i, 0)),
        out_shape=jax.ShapeDtypeStruct((b_pad, oc), jnp.float32),
        compiler_params=pltpu.CompilerParams(
            dimension_semantics=("parallel",),
            vmem_limit_bytes=32 * 1024 * 1024,
        ),
        cost_estimate=pl.CostEstimate(flops=flops, transcendentals=transcendentals,
                                      bytes_accessed=bytes_accessed),
    )(lens, xg, whh_cat, wout_pad, bout_pad)
    return out_pad[:b, :out_dim]


# ---------------------------------------------------------------------------
# Parameter packing (done once, outside the kernels; all transposes live here)
# ---------------------------------------------------------------------------
def _pack_x_weights(wih_f, wih_b):
    cols = []
    for g in range(4):                 # gate order i, f, g, o (PyTorch LSTM convention)
        cols.append(wih_f[g].T)        # (P, H) forward columns of gate g
        cols.append(wih_b[g].T)        # (P, H) backward columns of gate g
    return jnp.concatenate(cols, axis=1)            # (P, 8H)


def _pack_h_weights(whh_f, whh_b):
    hdim = whh_f.shape[-1]
    z = jnp.zeros((hdim, hdim), jnp.float32)
    cols = []
    for g in range(4):
        cols.append(jnp.concatenate([whh_f[g].T, z], axis=0))   # rows 0:H = h_fwd -> fwd gate
        cols.append(jnp.concatenate([z, whh_b[g].T], axis=0))   # rows H:2H = h_bwd -> bwd gate
    return jnp.concatenate(cols, axis=1)            # (2H, 8H) block-diagonal over directions


def _pack_bias(b_f, b_b):
    cols = []
    for g in range(4):
        cols.append(b_f[g])            # (1, H)
        cols.append(b_b[g])
    return jnp.concatenate(cols, axis=1)            # (1, 8H)


# ---------------------------------------------------------------------------
# Wrapper reproducing Dictionary_RNN.forward
# ---------------------------------------------------------------------------
def dictionary_rnn_forward(params, tens, t_lens):
    assert isinstance(t_lens, list)
    batch, maxlength, input_dim = tens.shape
    a = params["dictionary"]                         # (D, P)
    H = params["whh_f"].shape[-1]                    # hidden per direction
    out_dim = params["w_out"].shape[0]

    # ---- parameter-only packing / folding (tiny matrices, plain JAX) ----
    # TODO(synk): torch.inverse has no Pallas primitive; the (P,P) Gram system is solved
    # here with jnp.linalg.solve (better conditioned than an explicit inverse).
    ata = a.T @ a
    pinv_t = jnp.linalg.solve(ata, a.T).T            # (D, P) == A (A^T A)^{-1}
    pmat = pinv_t @ a.T                              # (D, D) reconstruction operator
    wx = _pack_x_weights(params["wih_f"], params["wih_b"])     # (P, 8H)
    bg = _pack_bias(params["b_f"], params["b_b"])              # (1, 8H)
    wxg = pinv_t @ wx                                # (D, 8H): dictionary proj folded into
                                                     #          the LSTM input projection
    whh_cat = _pack_h_weights(params["whh_f"], params["whh_b"]).astype(jnp.bfloat16)
    oc = ((out_dim + 127) // 128) * 128              # lane-pad the output Linear
    wout_pad = jnp.zeros((2 * H, oc), jnp.float32).at[:, :out_dim].set(params["w_out"].T)
    bout_pad = jnp.zeros((1, oc), jnp.float32).at[:, :out_dim].set(params["b_out"])

    # ---- kernel 1: dictionary loss + hoisted gate projections ----
    x_flat = tens.reshape(-1, input_dim)
    xg_flat, loss = dictionary_and_gate_projection(x_flat, wxg, bg, pmat)
    xg = xg_flat.reshape(batch, maxlength, -1)       # (B, T, 8H)

    # ---- kernel 2: fused bidirectional LSTM + Linear ----
    lens = jnp.asarray(t_lens, jnp.int32).reshape(batch, 1)
    x_out = bilstm_forward(xg, lens, whh_cat, wout_pad, bout_pad,
                           maxlength=maxlength, h_dir=H, out_dim=out_dim)
    return x_out, loss


# ---------------------------------------------------------------------------
# Deterministic parameter init (shapes mirror the PyTorch module __init__)
# ---------------------------------------------------------------------------
def init_params(key, input_dim, prototype_num, hidden_size, output_dim):
    H = hidden_size // 2
    ks = jax.random.split(key, 11)
    k_lstm = 1.0 / np.sqrt(H)
    k_lin = 1.0 / np.sqrt(hidden_size)

    def u(k, shape, bound):
        return jax.random.uniform(k, shape, jnp.float32, -bound, bound)

    return {
        # Variable(torch.rand(input_dim, prototype_num) / sqrt(input_dim))
        "dictionary": jax.random.uniform(ks[0], (input_dim, prototype_num),
                                         jnp.float32) / np.sqrt(input_dim),
        # LSTM forward / backward direction params, gate axis = (i, f, g, o)
        "wih_f": u(ks[1], (4, H, prototype_num), k_lstm),
        "whh_f": u(ks[2], (4, H, H), k_lstm),
        "b_f":   u(ks[3], (4, 1, H), k_lstm) + u(ks[4], (4, 1, H), k_lstm),  # b_ih + b_hh
        "wih_b": u(ks[5], (4, H, prototype_num), k_lstm),
        "whh_b": u(ks[6], (4, H, H), k_lstm),
        "b_b":   u(ks[7], (4, 1, H), k_lstm) + u(ks[8], (4, 1, H), k_lstm),
        # nn.Linear(hidden_size, output_dim)
        "w_out": u(ks[9], (output_dim, hidden_size), k_lin),
        "b_out": u(ks[10], (1, output_dim), k_lin),
    }


# ---------------------------------------------------------------------------
# Pure-JAX reference: straightforward (unfused, per-gate, per-direction) math.
# The recurrent-matmul operands are cast to bf16 (f32 accumulate) exactly like the
# kernel, so the comparison isolates structural/packing errors from precision policy.
# ---------------------------------------------------------------------------
def reference_forward(params, tens, t_lens):
    B, T, D = tens.shape
    A = params["dictionary"]
    x = tens.reshape(-1, D)
    pinv = jnp.linalg.inv(A.T @ A) @ A.T             # torch.inverse path, as in the module
    coef = x @ pinv.T
    loss = jnp.sum((x - coef @ A.T) ** 2)
    x2 = coef.reshape(B, T, -1)
    lens = jnp.asarray(t_lens, jnp.int32)[:, None]
    H = params["whh_f"].shape[-1]

    def rdot(hh, w):
        return jnp.dot(hh.astype(jnp.bfloat16), w.T.astype(jnp.bfloat16),
                       preferred_element_type=jnp.float32)

    def run_dir(wih, whh, b, order):
        h = jnp.zeros((B, H), jnp.float32)
        c = jnp.zeros((B, H), jnp.float32)
        for t in order:
            xt = x2[:, t, :]
            zi = xt @ wih[0].T + rdot(h, whh[0]) + b[0]
            zf = xt @ wih[1].T + rdot(h, whh[1]) + b[1]
            zg = xt @ wih[2].T + rdot(h, whh[2]) + b[2]
            zo = xt @ wih[3].T + rdot(h, whh[3]) + b[3]
            cn = jax.nn.sigmoid(zf) * c + jax.nn.sigmoid(zi) * jnp.tanh(zg)
            hn = jax.nn.sigmoid(zo) * jnp.tanh(cn)
            valid = t < lens
            h = jnp.where(valid, hn, h)
            c = jnp.where(valid, cn, c)
        return h

    hf = run_dir(params["wih_f"], params["whh_f"], params["b_f"], range(T))
    hb = run_dir(params["wih_b"], params["whh_b"], params["b_b"], range(T - 1, -1, -1))
    hcat = jnp.concatenate([hf, hb], axis=1)
    return hcat @ params["w_out"].T + params["b_out"], loss


if __name__ == "__main__":
    # param: input_dim=16, prototype_num=8, hidden_size=32 (H=16 per direction -> 8H=128),
    #        output_dim=4, maxlength=8, rnn_layer=1, bidirection=True
    input_dim, prototype_num, hidden_size, output_dim = 16, 8, 32, 4
    maxlength, batch = 8, 4

    key = jax.random.PRNGKey(0)
    kp, kx = jax.random.split(key)
    params = init_params(kp, input_dim, prototype_num, hidden_size, output_dim)
    tens = jax.random.normal(kx, (batch, maxlength, input_dim), jnp.float32)
    t_lens = [8, 5, 3, 6]

    out, loss = dictionary_rnn_forward(params, tens, t_lens)
    (out, loss) = jax.block_until_ready((out, loss))

    ref_out, ref_loss = reference_forward(params, tens, t_lens)
    np.testing.assert_allclose(np.asarray(out), np.asarray(ref_out),
                               rtol=2e-2, atol=2e-2)
    np.testing.assert_allclose(float(loss), float(ref_loss),
                               rtol=2e-2, atol=2e-2)
    assert out.shape == (batch, output_dim)
    assert np.isfinite(float(loss))
    print("KERNEL_OK")
</pallas_src>

<mosaic_0001>
module attributes {stable_mosaic.version = 11 : i64} {
  func.func @dict_proj_kernel(%arg0: i32, %arg1: memref<32x16xf32, #tpu.memory_space<vmem>>, %arg2: memref<16x128xf32, #tpu.memory_space<vmem>>, %arg3: memref<1x128xf32, #tpu.memory_space<vmem>>, %arg4: memref<16x16xf32, #tpu.memory_space<vmem>>, %arg5: memref<32x128xf32, #tpu.memory_space<vmem>>, %arg6: memref<32x1xf32, #tpu.memory_space<vmem>>) attributes {dimension_semantics = [#tpu.dimension_semantics<parallel>], iteration_bounds = array<i64: 1>, scalar_prefetch = 0 : i64, scratch_operands = 0 : i64, tpu.core_type = #tpu.core_type<tc>, window_params = [{transform_indices = @transform_0, window_bounds = array<i64: 32, 16>}, {pipeline_mode = #tpu.pipeline_mode<synchronous>, transform_indices = @transform_1, window_bounds = array<i64: 16, 128>}, {pipeline_mode = #tpu.pipeline_mode<synchronous>, transform_indices = @transform_2, window_bounds = array<i64: 1, 128>}, {pipeline_mode = #tpu.pipeline_mode<synchronous>, transform_indices = @transform_3, window_bounds = array<i64: 16, 16>}, {transform_indices = @transform_4, window_bounds = array<i64: 32, 128>}, {transform_indices = @transform_5, window_bounds = array<i64: 32, 1>}]} {
    %c0 = arith.constant 0 : index
    %c0_0 = arith.constant 0 : index
    %0 = vector.load %arg1[%c0, %c0_0] : memref<32x16xf32, #tpu.memory_space<vmem>>, vector<32x16xf32>
    %c0_1 = arith.constant 0 : index
    %c0_2 = arith.constant 0 : index
    %1 = vector.load %arg2[%c0_1, %c0_2] : memref<16x128xf32, #tpu.memory_space<vmem>>, vector<16x128xf32>
    %cst = arith.constant dense<0.000000e+00> : vector<32x128xf32>
    %2 = tpu.matmul %0, %1, %cst {dimension_numbers = #tpu.dot_dimension_numbers<[1], [0], [0], [1], [0, 0, 1, 1], [], []>} : vector<32x16xf32>, vector<16x128xf32>, vector<32x128xf32> -> vector<32x128xf32>
    %c0_3 = arith.constant 0 : index
    %c0_4 = arith.constant 0 : index
    %3 = vector.load %arg3[%c0_3, %c0_4] : memref<1x128xf32, #tpu.memory_space<vmem>>, vector<1x128xf32>
    %4 = vector.broadcast %3 : vector<1x128xf32> to vector<32x128xf32>
    %5 = arith.addf %2, %4 : vector<32x128xf32>
    %c0_5 = arith.constant 0 : index
    %c0_6 = arith.constant 0 : index
    %6 = vector.load %arg5[%c0_5, %c0_6] : memref<32x128xf32, #tpu.memory_space<vmem>>, vector<32x128xf32>
    tpu.vector_store %arg5[%c0_5, %c0_6], %5 {strides = array<i32>} : memref<32x128xf32, #tpu.memory_space<vmem>>, vector<32x128xf32>,
    %c0_7 = arith.constant 0 : index
    %c0_8 = arith.constant 0 : index
    %7 = vector.load %arg4[%c0_7, %c0_8] : memref<16x16xf32, #tpu.memory_space<vmem>>, vector<16x16xf32>
    %cst_9 = arith.constant dense<0.000000e+00> : vector<32x16xf32>
    %8 = tpu.matmul %0, %7, %cst_9 {dimension_numbers = #tpu.dot_dimension_numbers<[1], [0], [0], [1], [0, 0, 1, 1], [], []>} : vector<32x16xf32>, vector<16x16xf32>, vector<32x16xf32> -> vector<32x16xf32>
    %9 = arith.subf %0, %8 : vector<32x16xf32>
    %10 = arith.mulf %9, %9 : vector<32x16xf32>
    %cst_10 = arith.constant dense<0.000000e+00> : vector<32xf32>
    %11 = vector.multi_reduction <add>, %10, %cst_10 [1] : vector<32x16xf32> to vector<32xf32>
    %12 = vector.shape_cast %11 : vector<32xf32> to vector<32x1xf32>
    %c0_11 = arith.constant 0 : index
    %c0_12 = arith.constant 0 : index
    %13 = vector.load %arg6[%c0_11, %c0_12] : memref<32x1xf32, #tpu.memory_space<vmem>>, vector<32x1xf32>
    tpu.vector_store %arg6[%c0_11, %c0_12], %12 {strides = array<i32>} : memref<32x1xf32, #tpu.memory_space<vmem>>, vector<32x1xf32>,
    return
  }
  func.func @transform_0(%arg0: i32) -> (i32, i32) {
    %c0_i32 = arith.constant 0 : i32
    %c0_i32_0 = arith.constant 0 : i32
    return %arg0, %c0_i32 : i32, i32
  }
  func.func @transform_1(%arg0: i32) -> (i32, i32) {
    %c0_i32 = arith.constant 0 : i32
    %c0_i32_0 = arith.constant 0 : i32
    %c0_i32_1 = arith.constant 0 : i32
    return %c0_i32, %c0_i32_0 : i32, i32
  }
  func.func @transform_2(%arg0: i32) -> (i32, i32) {
    %c0_i32 = arith.constant 0 : i32
    %c0_i32_0 = arith.constant 0 : i32
    %c0_i32_1 = arith.constant 0 : i32
    return %c0_i32, %c0_i32_0 : i32, i32
  }
  func.func @transform_3(%arg0: i32) -> (i32, i32) {
    %c0_i32 = arith.constant 0 : i32
    %c0_i32_0 = arith.constant 0 : i32
    %c0_i32_1 = arith.constant 0 : i32
    return %c0_i32, %c0_i32_0 : i32, i32
  }
  func.func @transform_4(%arg0: i32) -> (i32, i32) {
    %c0_i32 = arith.constant 0 : i32
    %c0_i32_0 = arith.constant 0 : i32
    return %arg0, %c0_i32 : i32, i32
  }
  func.func @transform_5(%arg0: i32) -> (i32, i32) {
    %c0_i32 = arith.constant 0 : i32
    %c0_i32_0 = arith.constant 0 : i32
    return %arg0, %c0_i32 : i32, i32
  }
}

</mosaic_0001>

<llo_original>
// kernel: tpu_custom_call.1
$region0: #{tpu_custom_call.1}
  #allocation0 [shape = 'u32[]', space=smem, size = 0x4, offset = 0x4, fixed_abs, tag = 'smem constant byte address 0x4 - core index']
  #allocation1 [shape = 'u32[72,128]{1,0:T(1,128)}', space=vmem, size = 0x9000, scoped, tag = 'internal scratch']
  %s0 = inlined_call_operand.vmem [shape: f32[32,16], index: 0, kind: input, shape index: {}]
  %s1 = inlined_call_operand.vmem [shape: f32[16,128], index: 1, kind: input, shape index: {}]
  %s2 = inlined_call_operand.vmem [shape: f32[1,128], index: 2, kind: input, shape index: {}]
  %s3 = inlined_call_operand.vmem [shape: f32[16,16], index: 3, kind: input, shape index: {}]
  %s4 = inlined_call_operand.hbm [shape: f32[32,128], index: 4, kind: output, shape index: {0}]
  %s5 = inlined_call_operand.vmem [shape: f32[32,1], index: 5, kind: output, shape index: {1}]
  %6 = xla_tuple %s4, %s5
  %s7 = sld [smem:[#allocation0]]
  $region34: #{tpu_custom_call.1} parent=0
    _
  %s9 = ssub.s32 1, %s7
  %s10 = scalar_select 0, %s9, %s7
  $region1: #{tpu_custom_call.1} parent=0
    #allocation2 [shape = 'u8[16384]{0}', space=vmem, size = 0x4000, scoped, tag = 'output window, operand 0, single buffered']
    #allocation3 [shape = 's32[1]{0}', space=sflag, size = 0x4, scoped, tag = 'scoped memory for tpu_custom_call.1']
    %11 = vsyncpa [#allocation3], 0
    // Predicated region
    $region2: #{tpu_custom_call.1} parent=1 // pred_check
      _
    $region3: #{tpu_custom_call.1} parent=1 // pred_check_branch
      %13 = sbr.rel (0) target = $region5
    $region4: #{tpu_custom_call.1} parent=1 // pred_region
      _
    $region5: #{tpu_custom_call.1} parent=1 // pred_fallthru
      _
    // Predicated region
    $region6: #{tpu_custom_call.1} parent=1 // pred_check
      _
    $region7: #{tpu_custom_call.1} parent=1 // pred_check_branch
      %15 = sbr.rel (0) target = $region9
    $region8: #{tpu_custom_call.1} parent=1 // pred_region
      _
    $region9: #{tpu_custom_call.1} parent=1 // pred_fallthru
      _
    // Predicated region
    $region10: #{tpu_custom_call.1} parent=1 // pred_check
      _
    $region11: #{tpu_custom_call.1} parent=1 // pred_check_branch
      %17 = sbr.rel (0) target = $region13
    $region12: #{tpu_custom_call.1} parent=1 // pred_region
      _
    $region13: #{tpu_custom_call.1} parent=1 // pred_fallthru
      _
    // Predicated region
    $region14: #{tpu_custom_call.1} parent=1 // pred_check
      _
    $region15: #{tpu_custom_call.1} parent=1 // pred_check_branch
      %19 = sbr.rel (0) target = $region17
    $region16: #{tpu_custom_call.1} parent=1 // pred_region
      _
    $region17: #{tpu_custom_call.1} parent=1 // pred_fallthru
      _
    %v20 = vld [vmem:[%s0] sm:$0xff]
    %v21 = vld [vmem:[%s0 + $0x8] sm:$0xff]
    %v22 = vld [vmem:[%s0 + $0x10] sm:$0xff]
    %v23 = vld [vmem:[%s0 + $0x18] sm:$0xff]
    %v24 = vld [vmem:[%s1] sm:$0xff]
    %v25 = vld [vmem:[%s1 + $0x8] sm:$0xff]
    %v26 = vld [vmem:[%s2] sm:$0x1]
    %v28 = vperm.slane %v26, 0
    %vm30 = vcmask 130048
    %v32 = vsel %vm30, %v20, 0
    %v35 = vsel %vm30, %v21, 0
    %v38 = vsel %vm30, %v22, 0
    %v41 = vsel %vm30, %v23, 0
    %43 = vmatpush.msra.mxu0 0.0
    %44 = vmatpush.msra.mxu0 0.0
    %45 = vmatpush.msra.mxu0 0.0
    %46 = vmatpush.msra.mxu0 0.0
    %47 = vmatpush.msra.mxu0 0.0
    %48 = vmatpush.msra.mxu0 0.0
    %49 = vmatpush.msra.mxu0 0.0
    %50 = vmatpush.msra.mxu0 0.0
    %51 = vmatpush.msra.mxu0 0.0
    %52 = vmatpush.msra.mxu0 0.0
    %53 = vmatpush.msra.mxu0 0.0
    %54 = vmatpush.msra.mxu0 0.0
    %55 = vmatpush.msra.mxu0 0.0
    %56 = vmatpush.msra.mxu0 0.0
    %57 = vmatpush.msra.mxu0 %v25
    %58 = vmatpush.msra.mxu0 %v24
    %59 = vmatmul.f32.gmra.mxu0 %v32
    %v60 = vpop.f32.mrf.mxu0
    %v61 = vadd.f32 %v28, %v60
    %62 = vmatmul.f32.gmra.mxu0 %v35
    %v63 = vpop.f32.mrf.mxu0
    %v64 = vadd.f32 %v28, %v63
    %65 = vmatmul.f32.gmra.mxu0 %v38
    %v66 = vpop.f32.mrf.mxu0
    %v67 = vadd.f32 %v28, %v66
    %68 = vmatmul.f32.gmra.mxu0 %v41
    %v69 = vpop.f32.mrf.mxu0
    %v70 = vadd.f32 %v28, %v69
    %71 = vdwg.mxu0
    %72 = vst [vmem:[#allocation2] sm:$0xff] %v61
    %73 = vst [vmem:[#allocation2 + $0x8] sm:$0xff] %v64
    %74 = vst [vmem:[#allocation2 + $0x10] sm:$0xff] %v67
    %75 = vst [vmem:[#allocation2 + $0x18] sm:$0xff] %v70
    %v76 = vld [vmem:[%s3] sm:$0xff]
    %v77 = vld [vmem:[%s3 + $0x8] sm:$0xff]
    %78 = vmatpush.msra.mxu0 0.0
    %79 = vmatpush.msra.mxu0 0.0
    %80 = vmatpush.msra.mxu0 0.0
    %81 = vmatpush.msra.mxu0 0.0
    %82 = vmatpush.msra.mxu0 0.0
    %83 = vmatpush.msra.mxu0 0.0
    %84 = vmatpush.msra.mxu0 0.0
    %85 = vmatpush.msra.mxu0 0.0
    %86 = vmatpush.msra.mxu0 0.0
    %87 = vmatpush.msra.mxu0 0.0
    %88 = vmatpush.msra.mxu0 0.0
    %89 = vmatpush.msra.mxu0 0.0
    %90 = vmatpush.msra.mxu0 0.0
    %91 = vmatpush.msra.mxu0 0.0
    %92 = vmatpush.msra.mxu0 %v77
    %93 = vmatpush.msra.mxu0 %v76
    %94 = vmatmul.f32.gmra.mxu0 %v32
    %v95 = vpop.f32.mrf.mxu0
    %v96 = vadd.f32 0.0, %v95
    %97 = vmatmul.f32.gmra.mxu0 %v35
    %v98 = vpop.f32.mrf.mxu0
    %v99 = vadd.f32 0.0, %v98
    %100 = vmatmul.f32.gmra.mxu0 %v38
    %v101 = vpop.f32.mrf.mxu0
    %v102 = vadd.f32 0.0, %v101
    %103 = vmatmul.f32.gmra.mxu0 %v41
    %v104 = vpop.f32.mrf.mxu0
    %v105 = vadd.f32 0.0, %v104
    %106 = vdwg.mxu0
    %v107 = vsub.f32 %v20, %v96
    %v108 = vsub.f32 %v21, %v99
    %v109 = vsub.f32 %v22, %v102
    %v110 = vsub.f32 %v23, %v105
    %v111 = vmul.f32 %v107, %v107
    %v112 = vmul.f32 %v108, %v108
    %v113 = vmul.f32 %v109, %v109
    %v114 = vmul.f32 %v110, %v110
    %v115 = vsel %vm30, %v111, 0.0
    %116 = vadd.xlane.f32.xlu0 %v115
    %v117 = vpop.xlane.xlu0 %116
    %v118 = vsel %vm30, %v112, 0.0
    %119 = vadd.xlane.f32.xlu0 %v118
    %v120 = vpop.xlane.xlu0 %119
    %v121 = vsel %vm30, %v113, 0.0
    %122 = vadd.xlane.f32.xlu0 %v121
    %v123 = vpop.xlane.xlu0 %122
    %v124 = vsel %vm30, %v114, 0.0
    %125 = vadd.xlane.f32.xlu0 %v124
    %v126 = vpop.xlane.xlu0 %125
    %vm127 = vcmask 7168
    %128 = vst.msk [vmem:[%s5] sm:$0xff] %vm127, %v117
    %129 = vst.msk [vmem:[%s5 + $0x8] sm:$0xff] %vm127, %v120
    %130 = vst.msk [vmem:[%s5 + $0x10] sm:$0xff] %vm127, %v123
    %131 = vst.msk [vmem:[%s5 + $0x18] sm:$0xff] %vm127, %v126
    // Predicated region
    $region18: #{tpu_custom_call.1} parent=1 // pred_check
      _
    $region19: #{tpu_custom_call.1} parent=1 // pred_check_branch
      %133 = sbr.rel (0) target = $region21
    $region20: #{tpu_custom_call.1} parent=1 // pred_region
      %135 = vsyncadd [#allocation3], 0
      %s136 = sshll.u32 [#allocation2], 4
      %s137 = int_to_ptr.vmem [resolvable:$true] %s136
      %s138 = sshll.u32 %s4, 4
      %s139 = int_to_ptr.hbm [resolvable:$true] %s138
      %144 = dma.vmem_to_hbm [thread:$0]  %s137, 512, %s139, [#allocation3], 128, 128, 8
    $region21: #{tpu_custom_call.1} parent=1 // pred_fallthru
      _
    // Predicated region
    $region22: #{tpu_custom_call.1} parent=1 // pred_check
      _
    $region23: #{tpu_custom_call.1} parent=1 // pred_check_branch
      %146 = sbr.rel (0) target = $region25
    $region24: #{tpu_custom_call.1} parent=1 // pred_region
      _
    $region25: #{tpu_custom_call.1} parent=1 // pred_fallthru
      _
    // Predicated region
    $region26: #{tpu_custom_call.1} parent=1 // pred_check
      _
    $region27: #{tpu_custom_call.1} parent=1 // pred_check_branch
      %148 = sbr.rel (0) target = $region29
    $region28: #{tpu_custom_call.1} parent=1 // pred_region
      %150 = dma.done [#allocation3], 512
    $region29: #{tpu_custom_call.1} parent=1 // pred_fallthru
      _
    // Predicated region
    $region30: #{tpu_custom_call.1} parent=1 // pred_check
      _
    $region31: #{tpu_custom_call.1} parent=1 // pred_check_branch
      %152 = sbr.rel (0) target = $region33
    $region32: #{tpu_custom_call.1} parent=1 // pred_region
      _
    $region33: #{tpu_custom_call.1} parent=1 // pred_fallthru
      _
    %153 = vsyncpa [#allocation3], 1

</llo_original>
